<compile_context>
chip_gen: v5e
topology: v5e:2x2
jax: 0.10.0
libtpu: 0.0.40
codegen_flags: <defaults>
</compile_context>

<pallas_src>
import functools
import math

import jax
import jax.numpy as jnp
from jax import lax
from jax.experimental import pallas as pl
from jax.experimental.pallas import tpu as pltpu

N_STATES = 500      # Taxi-v3 observation space size
N_ACTIONS = 6       # Taxi-v3 action space size
HIDDEN = 128
HEAD_PAD = 128      # lane-dense padded head width (>= N_ACTIONS)


def dqn_kernel(idx_ref,                              # scalar-prefetch (SMEM)
               w1_ref, w2_ref, b2_ref,               # inputs (VMEM)
               wh_ref, bh_ref,
               out_ref,                              # output (VMEM)
               h1_ref,                               # scratch (VMEM)
               *, block_b):
    base = pl.program_id(0) * block_b

    # Layer 1: one-hot matmul == row gather of (W1 + b1).
    # w1_ref is (500, 1, 128) f32; dynamic leading-axis indexing yields (1,128)
    # which is stored straight into the (block_b, 128) scratch (plain vst).
    def gather_row(b, carry):
        h1_ref[pl.ds(b, 1), :] = w1_ref[idx_ref[base + b]]
        return carry

    lax.fori_loop(0, block_b, gather_row, None, unroll=True)

    h1 = jnp.maximum(h1_ref[...], 0.0)               # ReLU (b1 already fused)

    # Layer 2: bf16 MXU matmul, f32 accumulate / elementwise.
    h2 = jnp.dot(h1.astype(jnp.bfloat16), w2_ref[...],
                 preferred_element_type=jnp.float32)  # (block_b, 128)
    h2 = jnp.maximum(h2 + b2_ref[...], 0.0)

    # Fused dueling head: single (128, 128)-padded matmul + bias, lane-dense
    # output store (real Q-values live in columns [:N_ACTIONS]).
    q = jnp.dot(h2.astype(jnp.bfloat16), wh_ref[...],
                preferred_element_type=jnp.float32)   # (block_b, 128)
    out_ref[...] = q + bh_ref[...]


def dqn_forward(state_idx, p, *, block_b=128):
    """Dueling-DQN Q-values for integer Taxi states.

    state_idx: (B,) int32 state indices (network input is one_hot(state_idx)).
    p: prepared params from `prepare_params`.
    """
    B = state_idx.shape[0]
    # Clamp the batch tile: multiple of 8, at most 128, no larger than needed.
    block_b = max(8, min(block_b, pl.cdiv(B, 8) * 8))
    b_pad = pl.cdiv(B, block_b) * block_b
    idx = jnp.pad(state_idx.astype(jnp.int32), (0, b_pad - B))

    grid = (b_pad // block_b,)
    kernel = functools.partial(dqn_kernel, block_b=block_b)

    out = pl.pallas_call(
        kernel,
        out_shape=jax.ShapeDtypeStruct((b_pad, HEAD_PAD), jnp.float32),
        grid_spec=pltpu.PrefetchScalarGridSpec(
            num_scalar_prefetch=1,
            grid=grid,
            in_specs=[
                # Weights/biases: constant index_map -> loaded once, resident.
                pl.BlockSpec((N_STATES, 1, HIDDEN), lambda i, idx: (0, 0, 0)),
                pl.BlockSpec((HIDDEN, HIDDEN), lambda i, idx: (0, 0)),
                pl.BlockSpec((1, HIDDEN), lambda i, idx: (0, 0)),
                pl.BlockSpec((HIDDEN, HEAD_PAD), lambda i, idx: (0, 0)),
                pl.BlockSpec((1, HEAD_PAD), lambda i, idx: (0, 0)),
            ],
            out_specs=pl.BlockSpec((block_b, HEAD_PAD), lambda i, idx: (i, 0)),
            scratch_shapes=[pltpu.VMEM((block_b, HIDDEN), jnp.float32)],
        ),
        compiler_params=pltpu.CompilerParams(
            dimension_semantics=("parallel",)),
    )(idx, p["w1"], p["w2"], p["b2"], p["w_head"], p["b_head"])
    return out[:B, :N_ACTIONS]


def init_params(key):
    """PyTorch-style uniform(-1/sqrt(fan_in), 1/sqrt(fan_in)) init.

    Weights stored pre-transposed, shape (in_features, out_features); biases
    (1, out_features).  Everything f32 (reference precision).
    """
    def linear(key, fan_in, fan_out):
        kw, kb = jax.random.split(key)
        bound = 1.0 / math.sqrt(fan_in)
        w = jax.random.uniform(kw, (fan_in, fan_out), jnp.float32, -bound, bound)
        b = jax.random.uniform(kb, (1, fan_out), jnp.float32, -bound, bound)
        return w, b

    k1, k2, k3, k4 = jax.random.split(key, 4)
    w1, b1 = linear(k1, N_STATES, HIDDEN)
    w2, b2 = linear(k2, HIDDEN, HIDDEN)
    wv, bv = linear(k3, HIDDEN, 1)
    wa, ba = linear(k4, HIDDEN, N_ACTIONS)
    return dict(w1=w1, b1=b1, w2=w2, b2=b2, wv=wv, bv=bv, wa=wa, ba=ba)


def prepare_params(params):
    """Host-side precompute: fold b1 into W1, fuse + lane-pad the dueling head,
    cast MXU weights to bf16, reshape W1 for leading-axis gathers."""
    # Fold b1 into W1: relu(W1[idx] + b1) == relu((W1 + b1)[idx]).
    w1_fused = params["w1"] + params["b1"]                          # (500, 128)

    # Fused dueling head (exact algebra of v + (a - mean(a))), zero-padded to
    # 128 lanes for a lane-dense output store.
    w_head = (params["wv"] + params["wa"]
              - params["wa"].mean(axis=1, keepdims=True))           # (128, 6)
    b_head = (params["bv"] + params["ba"]
              - params["ba"].mean(axis=1, keepdims=True))           # (1, 6)
    w_head_pad = jnp.zeros((HIDDEN, HEAD_PAD), jnp.float32).at[:, :N_ACTIONS].set(w_head)
    b_head_pad = jnp.zeros((1, HEAD_PAD), jnp.float32).at[:, :N_ACTIONS].set(b_head)

    return dict(
        w1=w1_fused.reshape(N_STATES, 1, HIDDEN).astype(jnp.float32),
        w2=params["w2"].astype(jnp.bfloat16),
        b2=params["b2"].astype(jnp.float32),
        w_head=w_head_pad.astype(jnp.bfloat16),
        b_head=b_head_pad.astype(jnp.float32),
    )


def dqn_reference(x, p):
    """Full-precision reference with the original (un-fused) dueling head."""
    h1 = jax.nn.relu(x @ p["w1"] + p["b1"])
    h2 = jax.nn.relu(h1 @ p["w2"] + p["b2"])
    v = h2 @ p["wv"] + p["bv"]
    a = h2 @ p["wa"] + p["ba"]
    return v + (a - a.mean(axis=1, keepdims=True))


if __name__ == "__main__":
    key = jax.random.PRNGKey(0)
    kp, kx1, kx2 = jax.random.split(key, 3)

    raw_params = init_params(kp)
    params = prepare_params(raw_params)

    # --- Small batch (single grid step, block_b clamps to 8) -----------------
    B_small = 8
    idx_small = jax.random.randint(kx1, (B_small,), 0, N_STATES, dtype=jnp.int32)
    out_small = jax.block_until_ready(dqn_forward(idx_small, params))

    x_small = jax.nn.one_hot(idx_small, N_STATES, dtype=jnp.float32)
    ref_small = dqn_reference(x_small, raw_params)
    assert out_small.shape == (B_small, N_ACTIONS)
    assert jnp.allclose(out_small, ref_small, atol=3e-2, rtol=3e-2), \
        "small-batch mismatch vs reference"

    # --- Larger batch: 2 grid steps (block_b=128) + tail padding -------------
    B_big = 200
    idx_big = jax.random.randint(kx2, (B_big,), 0, N_STATES, dtype=jnp.int32)
    out_big = jax.block_until_ready(dqn_forward(idx_big, params, block_b=128))

    x_big = jax.nn.one_hot(idx_big, N_STATES, dtype=jnp.float32)
    ref_big = dqn_reference(x_big, raw_params)
    assert out_big.shape == (B_big, N_ACTIONS)
    assert jnp.allclose(out_big, ref_big, atol=3e-2, rtol=3e-2), \
        "large-batch mismatch vs reference"

    print("KERNEL_OK")
</pallas_src>

<mosaic_0001>
module attributes {stable_mosaic.version = 11 : i64} {
  func.func @dqn_kernel(%arg0: i32, %arg1: memref<8xi32, #tpu.memory_space<smem>>, %arg2: memref<500x1x128xf32, #tpu.memory_space<vmem>>, %arg3: memref<128x128xbf16, #tpu.memory_space<vmem>>, %arg4: memref<1x128xf32, #tpu.memory_space<vmem>>, %arg5: memref<128x128xbf16, #tpu.memory_space<vmem>>, %arg6: memref<1x128xf32, #tpu.memory_space<vmem>>, %arg7: memref<8x128xf32, #tpu.memory_space<vmem>>, %arg8: memref<8x128xf32, #tpu.memory_space<vmem>>) attributes {dimension_semantics = [#tpu.dimension_semantics<parallel>], iteration_bounds = array<i64: 1>, scalar_prefetch = 1 : i64, scratch_operands = 1 : i64, tpu.core_type = #tpu.core_type<tc>, window_params = [{pipeline_mode = #tpu.pipeline_mode<synchronous>, transform_indices = @transform_0, window_bounds = array<i64: 500, 1, 128>}, {pipeline_mode = #tpu.pipeline_mode<synchronous>, transform_indices = @transform_1, window_bounds = array<i64: 128, 128>}, {pipeline_mode = #tpu.pipeline_mode<synchronous>, transform_indices = @transform_2, window_bounds = array<i64: 1, 128>}, {pipeline_mode = #tpu.pipeline_mode<synchronous>, transform_indices = @transform_3, window_bounds = array<i64: 128, 128>}, {pipeline_mode = #tpu.pipeline_mode<synchronous>, transform_indices = @transform_4, window_bounds = array<i64: 1, 128>}, {transform_indices = @transform_5, window_bounds = array<i64: 8, 128>}]} {
    %c8_i32 = arith.constant 8 : i32
    %0 = arith.muli %arg0, %c8_i32 : i32
    %c0_i32 = arith.constant 0 : i32
    %1 = arith.addi %0, %c0_i32 : i32
    %2 = arith.index_cast %1 : i32 to index
    %3 = memref.load %arg1[%2] : memref<8xi32, #tpu.memory_space<smem>>
    %4 = arith.index_cast %3 : i32 to index
    %c0 = arith.constant 0 : index
    %c0_0 = arith.constant 0 : index
    %5 = vector.load %arg2[%4, %c0, %c0_0] : memref<500x1x128xf32, #tpu.memory_space<vmem>>, vector<1x1x128xf32>
    %6 = vector.shape_cast %5 : vector<1x1x128xf32> to vector<1x128xf32>
    %7 = arith.index_cast %c0_i32 : i32 to index
    %c0_1 = arith.constant 0 : index
    %8 = vector.load %arg8[%7, %c0_1] : memref<8x128xf32, #tpu.memory_space<vmem>>, vector<1x128xf32>
    tpu.vector_store %arg8[%7, %c0_1], %6 {strides = array<i32>} : memref<8x128xf32, #tpu.memory_space<vmem>>, vector<1x128xf32>,
    %c1_i32 = arith.constant 1 : i32
    %9 = arith.addi %0, %c1_i32 : i32
    %10 = arith.index_cast %9 : i32 to index
    %11 = memref.load %arg1[%10] : memref<8xi32, #tpu.memory_space<smem>>
    %12 = arith.index_cast %11 : i32 to index
    %c0_2 = arith.constant 0 : index
    %c0_3 = arith.constant 0 : index
    %13 = vector.load %arg2[%12, %c0_2, %c0_3] : memref<500x1x128xf32, #tpu.memory_space<vmem>>, vector<1x1x128xf32>
    %14 = vector.shape_cast %13 : vector<1x1x128xf32> to vector<1x128xf32>
    %15 = arith.index_cast %c1_i32 : i32 to index
    %c0_4 = arith.constant 0 : index
    %16 = vector.load %arg8[%15, %c0_4] : memref<8x128xf32, #tpu.memory_space<vmem>>, vector<1x128xf32>
    tpu.vector_store %arg8[%15, %c0_4], %14 {strides = array<i32>} : memref<8x128xf32, #tpu.memory_space<vmem>>, vector<1x128xf32>,
    %c2_i32 = arith.constant 2 : i32
    %17 = arith.addi %0, %c2_i32 : i32
    %18 = arith.index_cast %17 : i32 to index
    %19 = memref.load %arg1[%18] : memref<8xi32, #tpu.memory_space<smem>>
    %20 = arith.index_cast %19 : i32 to index
    %c0_5 = arith.constant 0 : index
    %c0_6 = arith.constant 0 : index
    %21 = vector.load %arg2[%20, %c0_5, %c0_6] : memref<500x1x128xf32, #tpu.memory_space<vmem>>, vector<1x1x128xf32>
    %22 = vector.shape_cast %21 : vector<1x1x128xf32> to vector<1x128xf32>
    %23 = arith.index_cast %c2_i32 : i32 to index
    %c0_7 = arith.constant 0 : index
    %24 = vector.load %arg8[%23, %c0_7] : memref<8x128xf32, #tpu.memory_space<vmem>>, vector<1x128xf32>
    tpu.vector_store %arg8[%23, %c0_7], %22 {strides = array<i32>} : memref<8x128xf32, #tpu.memory_space<vmem>>, vector<1x128xf32>,
    %c3_i32 = arith.constant 3 : i32
    %25 = arith.addi %0, %c3_i32 : i32
    %26 = arith.index_cast %25 : i32 to index
    %27 = memref.load %arg1[%26] : memref<8xi32, #tpu.memory_space<smem>>
    %28 = arith.index_cast %27 : i32 to index
    %c0_8 = arith.constant 0 : index
    %c0_9 = arith.constant 0 : index
    %29 = vector.load %arg2[%28, %c0_8, %c0_9] : memref<500x1x128xf32, #tpu.memory_space<vmem>>, vector<1x1x128xf32>
    %30 = vector.shape_cast %29 : vector<1x1x128xf32> to vector<1x128xf32>
    %31 = arith.index_cast %c3_i32 : i32 to index
    %c0_10 = arith.constant 0 : index
    %32 = vector.load %arg8[%31, %c0_10] : memref<8x128xf32, #tpu.memory_space<vmem>>, vector<1x128xf32>
    tpu.vector_store %arg8[%31, %c0_10], %30 {strides = array<i32>} : memref<8x128xf32, #tpu.memory_space<vmem>>, vector<1x128xf32>,
    %c4_i32 = arith.constant 4 : i32
    %33 = arith.addi %0, %c4_i32 : i32
    %34 = arith.index_cast %33 : i32 to index
    %35 = memref.load %arg1[%34] : memref<8xi32, #tpu.memory_space<smem>>
    %36 = arith.index_cast %35 : i32 to index
    %c0_11 = arith.constant 0 : index
    %c0_12 = arith.constant 0 : index
    %37 = vector.load %arg2[%36, %c0_11, %c0_12] : memref<500x1x128xf32, #tpu.memory_space<vmem>>, vector<1x1x128xf32>
    %38 = vector.shape_cast %37 : vector<1x1x128xf32> to vector<1x128xf32>
    %39 = arith.index_cast %c4_i32 : i32 to index
    %c0_13 = arith.constant 0 : index
    %40 = vector.load %arg8[%39, %c0_13] : memref<8x128xf32, #tpu.memory_space<vmem>>, vector<1x128xf32>
    tpu.vector_store %arg8[%39, %c0_13], %38 {strides = array<i32>} : memref<8x128xf32, #tpu.memory_space<vmem>>, vector<1x128xf32>,
    %c5_i32 = arith.constant 5 : i32
    %41 = arith.addi %0, %c5_i32 : i32
    %42 = arith.index_cast %41 : i32 to index
    %43 = memref.load %arg1[%42] : memref<8xi32, #tpu.memory_space<smem>>
    %44 = arith.index_cast %43 : i32 to index
    %c0_14 = arith.constant 0 : index
    %c0_15 = arith.constant 0 : index
    %45 = vector.load %arg2[%44, %c0_14, %c0_15] : memref<500x1x128xf32, #tpu.memory_space<vmem>>, vector<1x1x128xf32>
    %46 = vector.shape_cast %45 : vector<1x1x128xf32> to vector<1x128xf32>
    %47 = arith.index_cast %c5_i32 : i32 to index
    %c0_16 = arith.constant 0 : index
    %48 = vector.load %arg8[%47, %c0_16] : memref<8x128xf32, #tpu.memory_space<vmem>>, vector<1x128xf32>
    tpu.vector_store %arg8[%47, %c0_16], %46 {strides = array<i32>} : memref<8x128xf32, #tpu.memory_space<vmem>>, vector<1x128xf32>,
    %c6_i32 = arith.constant 6 : i32
    %49 = arith.addi %0, %c6_i32 : i32
    %50 = arith.index_cast %49 : i32 to index
    %51 = memref.load %arg1[%50] : memref<8xi32, #tpu.memory_space<smem>>
    %52 = arith.index_cast %51 : i32 to index
    %c0_17 = arith.constant 0 : index
    %c0_18 = arith.constant 0 : index
    %53 = vector.load %arg2[%52, %c0_17, %c0_18] : memref<500x1x128xf32, #tpu.memory_space<vmem>>, vector<1x1x128xf32>
    %54 = vector.shape_cast %53 : vector<1x1x128xf32> to vector<1x128xf32>
    %55 = arith.index_cast %c6_i32 : i32 to index
    %c0_19 = arith.constant 0 : index
    %56 = vector.load %arg8[%55, %c0_19] : memref<8x128xf32, #tpu.memory_space<vmem>>, vector<1x128xf32>
    tpu.vector_store %arg8[%55, %c0_19], %54 {strides = array<i32>} : memref<8x128xf32, #tpu.memory_space<vmem>>, vector<1x128xf32>,
    %c7_i32 = arith.constant 7 : i32
    %57 = arith.addi %0, %c7_i32 : i32
    %58 = arith.index_cast %57 : i32 to index
    %59 = memref.load %arg1[%58] : memref<8xi32, #tpu.memory_space<smem>>
    %60 = arith.index_cast %59 : i32 to index
    %c0_20 = arith.constant 0 : index
    %c0_21 = arith.constant 0 : index
    %61 = vector.load %arg2[%60, %c0_20, %c0_21] : memref<500x1x128xf32, #tpu.memory_space<vmem>>, vector<1x1x128xf32>
    %62 = vector.shape_cast %61 : vector<1x1x128xf32> to vector<1x128xf32>
    %63 = arith.index_cast %c7_i32 : i32 to index
    %c0_22 = arith.constant 0 : index
    %64 = vector.load %arg8[%63, %c0_22] : memref<8x128xf32, #tpu.memory_space<vmem>>, vector<1x128xf32>
    tpu.vector_store %arg8[%63, %c0_22], %62 {strides = array<i32>} : memref<8x128xf32, #tpu.memory_space<vmem>>, vector<1x128xf32>,
    %c8_i32_23 = arith.constant 8 : i32
    %c0_24 = arith.constant 0 : index
    %c0_25 = arith.constant 0 : index
    %65 = vector.load %arg8[%c0_24, %c0_25] : memref<8x128xf32, #tpu.memory_space<vmem>>, vector<8x128xf32>
    %cst = arith.constant 0.000000e+00 : f32
    %66 = vector.broadcast %cst : f32 to vector<8x128xf32>
    %67 = arith.maximumf %65, %66 : vector<8x128xf32>
    %68 = arith.truncf %67 : vector<8x128xf32> to vector<8x128xbf16>
    %c0_26 = arith.constant 0 : index
    %c0_27 = arith.constant 0 : index
    %69 = vector.load %arg3[%c0_26, %c0_27] : memref<128x128xbf16, #tpu.memory_space<vmem>>, vector<128x128xbf16>
    %cst_28 = arith.constant dense<0.000000e+00> : vector<8x128xf32>
    %70 = tpu.matmul %68, %69, %cst_28 {dimension_numbers = #tpu.dot_dimension_numbers<[1], [0], [0], [1], [0, 0, 1, 1], [], []>} : vector<8x128xbf16>, vector<128x128xbf16>, vector<8x128xf32> -> vector<8x128xf32>
    %c0_29 = arith.constant 0 : index
    %c0_30 = arith.constant 0 : index
    %71 = vector.load %arg4[%c0_29, %c0_30] : memref<1x128xf32, #tpu.memory_space<vmem>>, vector<1x128xf32>
    %72 = vector.broadcast %71 : vector<1x128xf32> to vector<8x128xf32>
    %73 = arith.addf %70, %72 : vector<8x128xf32>
    %cst_31 = arith.constant 0.000000e+00 : f32
    %74 = vector.broadcast %cst_31 : f32 to vector<8x128xf32>
    %75 = arith.maximumf %73, %74 : vector<8x128xf32>
    %76 = arith.truncf %75 : vector<8x128xf32> to vector<8x128xbf16>
    %c0_32 = arith.constant 0 : index
    %c0_33 = arith.constant 0 : index
    %77 = vector.load %arg5[%c0_32, %c0_33] : memref<128x128xbf16, #tpu.memory_space<vmem>>, vector<128x128xbf16>
    %cst_34 = arith.constant dense<0.000000e+00> : vector<8x128xf32>
    %78 = tpu.matmul %76, %77, %cst_34 {dimension_numbers = #tpu.dot_dimension_numbers<[1], [0], [0], [1], [0, 0, 1, 1], [], []>} : vector<8x128xbf16>, vector<128x128xbf16>, vector<8x128xf32> -> vector<8x128xf32>
    %c0_35 = arith.constant 0 : index
    %c0_36 = arith.constant 0 : index
    %79 = vector.load %arg6[%c0_35, %c0_36] : memref<1x128xf32, #tpu.memory_space<vmem>>, vector<1x128xf32>
    %80 = vector.broadcast %79 : vector<1x128xf32> to vector<8x128xf32>
    %81 = arith.addf %78, %80 : vector<8x128xf32>
    %c0_37 = arith.constant 0 : index
    %c0_38 = arith.constant 0 : index
    %82 = vector.load %arg7[%c0_37, %c0_38] : memref<8x128xf32, #tpu.memory_space<vmem>>, vector<8x128xf32>
    tpu.vector_store %arg7[%c0_37, %c0_38], %81 {strides = array<i32>} : memref<8x128xf32, #tpu.memory_space<vmem>>, vector<8x128xf32>,
    return
  }
  func.func @transform_0(%arg0: i32, %arg1: memref<8xi32, #tpu.memory_space<smem>>) -> (i32, i32, i32) {
    %c0_i32 = arith.constant 0 : i32
    %c0_i32_0 = arith.constant 0 : i32
    %c0_i32_1 = arith.constant 0 : i32
    %c0_i32_2 = arith.constant 0 : i32
    return %c0_i32, %c0_i32_0, %c0_i32_1 : i32, i32, i32
  }
  func.func @transform_1(%arg0: i32, %arg1: memref<8xi32, #tpu.memory_space<smem>>) -> (i32, i32) {
    %c0_i32 = arith.constant 0 : i32
    %c0_i32_0 = arith.constant 0 : i32
    %c0_i32_1 = arith.constant 0 : i32
    return %c0_i32, %c0_i32_0 : i32, i32
  }
  func.func @transform_2(%arg0: i32, %arg1: memref<8xi32, #tpu.memory_space<smem>>) -> (i32, i32) {
    %c0_i32 = arith.constant 0 : i32
    %c0_i32_0 = arith.constant 0 : i32
    %c0_i32_1 = arith.constant 0 : i32
    return %c0_i32, %c0_i32_0 : i32, i32
  }
  func.func @transform_3(%arg0: i32, %arg1: memref<8xi32, #tpu.memory_space<smem>>) -> (i32, i32) {
    %c0_i32 = arith.constant 0 : i32
    %c0_i32_0 = arith.constant 0 : i32
    %c0_i32_1 = arith.constant 0 : i32
    return %c0_i32, %c0_i32_0 : i32, i32
  }
  func.func @transform_4(%arg0: i32, %arg1: memref<8xi32, #tpu.memory_space<smem>>) -> (i32, i32) {
    %c0_i32 = arith.constant 0 : i32
    %c0_i32_0 = arith.constant 0 : i32
    %c0_i32_1 = arith.constant 0 : i32
    return %c0_i32, %c0_i32_0 : i32, i32
  }
  func.func @transform_5(%arg0: i32, %arg1: memref<8xi32, #tpu.memory_space<smem>>) -> (i32, i32) {
    %c0_i32 = arith.constant 0 : i32
    %c0_i32_0 = arith.constant 0 : i32
    return %arg0, %c0_i32 : i32, i32
  }
}

</mosaic_0001>

<llo_original>
// kernel: tpu_custom_call.1
$region0: #{tpu_custom_call.1}
  #allocation0 [shape = 'u32[]', space=smem, size = 0x4, offset = 0x4, fixed_abs, tag = 'smem constant byte address 0x4 - core index']
  #allocation1 [shape = 'u32[72,128]{1,0:T(1,128)}', space=vmem, size = 0x9000, scoped, tag = 'internal scratch']
  #allocation2 [shape = 'f32[8,128]{1,0:T(8,128)}', space=vmem, size = 0x1000, scoped, tag = 'scratch operand']
  #allocation3 [shape = 's32[1]{0}', space=sflag, size = 0x4, scoped, tag = 'scoped memory for tpu_custom_call.1']
  #allocation4 [shape = 'u8[512]{0}', space=smem, size = 0x200, scoped, tag = 'prefetched SMEM operand 0']
  %s0 = inlined_call_operand.hbm [shape: s32[8], index: 0, kind: input, shape index: {}]
  %s1 = inlined_call_operand.hbm [shape: f32[500,1,128], index: 1, kind: input, shape index: {}]
  %s2 = inlined_call_operand.hbm [shape: bf16[128,128], index: 2, kind: input, shape index: {}]
  %s3 = inlined_call_operand.vmem [shape: f32[1,128], index: 3, kind: input, shape index: {}]
  %s4 = inlined_call_operand.hbm [shape: bf16[128,128], index: 4, kind: input, shape index: {}]
  %s5 = inlined_call_operand.vmem [shape: f32[1,128], index: 5, kind: input, shape index: {}]
  %s6 = inlined_call_operand.hbm [shape: f32[8,128], index: 6, kind: output, shape index: {}]
  %s7 = sld [smem:[#allocation0]]
  $region42: #{tpu_custom_call.1} parent=0
    _
  %s9 = ssub.s32 1, %s7
  %s10 = scalar_select 0, %s9, %s7
  %s12 = sshll.u32 %s0, 4
  %s13 = int_to_ptr.hbm [resolvable:$true] %s12
  %15 = dma.hbm_to_smem %s13, 16, [#allocation4], [#allocation3]
  %17 = dma.done [#allocation3], 16
  %18 = sfence
  $region1: #{tpu_custom_call.1} parent=0
    #allocation5 [shape = 'u8[256000]{0}', space=vmem, size = 0x3e800, scoped, tag = 'input window, operand 1, single buffered']
    #allocation6 [shape = 's32[1]{0}', space=sflag, size = 0x4, scoped, tag = 'scoped memory for tpu_custom_call.1']
    #allocation7 [shape = 's32[1]{0}', space=sflag, size = 0x4, scoped, tag = 'scoped memory for tpu_custom_call.1']
    #allocation8 [shape = 'u8[32768]{0}', space=vmem, size = 0x8000, scoped, tag = 'input window, operand 2, single buffered']
    #allocation9 [shape = 's32[1]{0}', space=sflag, size = 0x4, scoped, tag = 'scoped memory for tpu_custom_call.1']
    #allocation10 [shape = 'u8[32768]{0}', space=vmem, size = 0x8000, scoped, tag = 'input window, operand 4, single buffered']
    #allocation11 [shape = 'u8[4096]{0}', space=vmem, size = 0x1000, scoped, tag = 'output window, operand 0, single buffered']
    %19 = vsyncpa [#allocation6], 0
    %20 = vsyncpa [#allocation9], 0
    %21 = vsyncpa [#allocation7], 0
    // Predicated region
    $region2: #{tpu_custom_call.1} parent=1 // pred_check
      _
    $region3: #{tpu_custom_call.1} parent=1 // pred_check_branch
      %23 = sbr.rel (0) target = $region5
    $region4: #{tpu_custom_call.1} parent=1 // pred_region
      %25 = vsyncadd [#allocation6], 0
      %s26 = sshll.u32 %s1, 4
      %s27 = int_to_ptr.hbm [resolvable:$true] %s26
      %s28 = sshll.u32 [#allocation5], 4
      %s29 = int_to_ptr.vmem [resolvable:$true] %s28
      %34 = dma.hbm_to_vmem [thread:$0]  %s27, 8000, %s29, [#allocation6], 16, 16, 1
    $region5: #{tpu_custom_call.1} parent=1 // pred_fallthru
      _
    // Predicated region
    $region6: #{tpu_custom_call.1} parent=1 // pred_check
      _
    $region7: #{tpu_custom_call.1} parent=1 // pred_check_branch
      %36 = sbr.rel (0) target = $region9
    $region8: #{tpu_custom_call.1} parent=1 // pred_region
      %38 = vsyncadd [#allocation9], 0
      %s39 = sshll.u32 %s2, 4
      %s40 = int_to_ptr.hbm [resolvable:$true] %s39
      %s41 = sshll.u32 [#allocation8], 4
      %s42 = int_to_ptr.vmem [resolvable:$true] %s41
      %47 = dma.hbm_to_vmem [thread:$0]  %s40, 1024, %s42, [#allocation9], 64, 64, 4
    $region9: #{tpu_custom_call.1} parent=1 // pred_fallthru
      _
    // Predicated region
    $region10: #{tpu_custom_call.1} parent=1 // pred_check
      _
    $region11: #{tpu_custom_call.1} parent=1 // pred_check_branch
      %49 = sbr.rel (0) target = $region13
    $region12: #{tpu_custom_call.1} parent=1 // pred_region
      _
    $region13: #{tpu_custom_call.1} parent=1 // pred_fallthru
      _
    // Predicated region
    $region14: #{tpu_custom_call.1} parent=1 // pred_check
      _
    $region15: #{tpu_custom_call.1} parent=1 // pred_check_branch
      %51 = sbr.rel (0) target = $region17
    $region16: #{tpu_custom_call.1} parent=1 // pred_region
      %53 = vsyncadd [#allocation9], 0
      %s54 = sshll.u32 %s4, 4
      %s55 = int_to_ptr.hbm [resolvable:$true] %s54
      %s56 = sshll.u32 [#allocation10], 4
      %s57 = int_to_ptr.vmem [resolvable:$true] %s56
      %62 = dma.hbm_to_vmem [thread:$0]  %s55, 1024, %s57, [#allocation9], 64, 64, 4
    $region17: #{tpu_custom_call.1} parent=1 // pred_fallthru
      _
    // Predicated region
    $region18: #{tpu_custom_call.1} parent=1 // pred_check
      _
    $region19: #{tpu_custom_call.1} parent=1 // pred_check_branch
      %64 = sbr.rel (0) target = $region21
    $region20: #{tpu_custom_call.1} parent=1 // pred_region
      _
    $region21: #{tpu_custom_call.1} parent=1 // pred_fallthru
      _
    // Predicated region
    $region22: #{tpu_custom_call.1} parent=1 // pred_check
      _
    $region23: #{tpu_custom_call.1} parent=1 // pred_check_branch
      %66 = sbr.rel (0) target = $region25
    $region24: #{tpu_custom_call.1} parent=1 // pred_region
      %68 = dma.done [#allocation6], 8000
    $region25: #{tpu_custom_call.1} parent=1 // pred_fallthru
      _
    // Predicated region
    $region26: #{tpu_custom_call.1} parent=1 // pred_check
      _
    $region27: #{tpu_custom_call.1} parent=1 // pred_check_branch
      %70 = sbr.rel (0) target = $region29
    $region28: #{tpu_custom_call.1} parent=1 // pred_region
      %72 = dma.done [#allocation9], 1024
    $region29: #{tpu_custom_call.1} parent=1 // pred_fallthru
      _
    // Predicated region
    $region30: #{tpu_custom_call.1} parent=1 // pred_check
      _
    $region31: #{tpu_custom_call.1} parent=1 // pred_check_branch
      %74 = sbr.rel (0) target = $region33
    $region32: #{tpu_custom_call.1} parent=1 // pred_region
      %76 = dma.done [#allocation9], 1024
    $region33: #{tpu_custom_call.1} parent=1 // pred_fallthru
      _
    %s77 = smul.u32 0, 8
    %s78 = sld [smem:[#allocation4 + %s77]]
    %s79 = scalar_lea.vmem [#allocation5], %s78
    %v80 = vld [vmem:[%s79] sm:$0x1]
    %81 = vst [vmem:[#allocation2] sm:$0x1] %v80
    %s82 = sadd.s32 %s77, 1
    %s83 = sld [smem:[#allocation4 + %s82]]
    %s84 = scalar_lea.vmem [#allocation5], %s83
    %v85 = vld [vmem:[%s84] sm:$0x1]
    %86 = vst [vmem:[#allocation2 + $0x1] sm:$0x1] %v85
    %s87 = sadd.s32 %s77, 2
    %s88 = sld [smem:[#allocation4 + %s87]]
    %s89 = scalar_lea.vmem [#allocation5], %s88
    %v90 = vld [vmem:[%s89] sm:$0x1]
    %91 = vst [vmem:[#allocation2 + $0x2] sm:$0x1] %v90
    %s92 = sadd.s32 %s77, 3
    %s93 = sld [smem:[#allocation4 + %s92]]
    %s94 = scalar_lea.vmem [#allocation5], %s93
    %v95 = vld [vmem:[%s94] sm:$0x1]
    %96 = vst [vmem:[#allocation2 + $0x3] sm:$0x1] %v95
    %s97 = sadd.s32 %s77, 4
    %s98 = sld [smem:[#allocation4 + %s97]]
    %s99 = scalar_lea.vmem [#allocation5], %s98
    %v100 = vld [vmem:[%s99] sm:$0x1]
    %101 = vst [vmem:[#allocation2 + $0x4] sm:$0x1] %v100
    %s102 = sadd.s32 %s77, 5
    %s103 = sld [smem:[#allocation4 + %s102]]
    %s104 = scalar_lea.vmem [#allocation5], %s103
    %v105 = vld [vmem:[%s104] sm:$0x1]
    %106 = vst [vmem:[#allocation2 + $0x5] sm:$0x1] %v105
    %s107 = sadd.s32 %s77, 6
    %s108 = sld [smem:[#allocation4 + %s107]]
    %s109 = scalar_lea.vmem [#allocation5], %s108
    %v110 = vld [vmem:[%s109] sm:$0x1]
    %111 = vst [vmem:[#allocation2 + $0x6] sm:$0x1] %v110
    %s112 = sadd.s32 %s77, 7
    %s113 = sld [smem:[#allocation4 + %s112]]
    %s114 = scalar_lea.vmem [#allocation5], %s113
    %v115 = vld [vmem:[%s114] sm:$0x1]
    %116 = vst [vmem:[#allocation2 + $0x7] sm:$0x1] %v115
    %v117 = vld [vmem:[#allocation2] sm:$0xff]
    %v118 = vmax.f32 %v117, 0.0
    %v119 = vpack.c.bf16 %v118, %v118
    %v120 = vld [vmem:[#allocation8] sm:$0xf]
    %v121 = vld [vmem:[#allocation8 + $0x4] sm:$0xf]
    %v122 = vld [vmem:[#allocation8 + $0x8] sm:$0xf]
    %v123 = vld [vmem:[#allocation8 + $0xc] sm:$0xf]
    %v124 = vld [vmem:[#allocation8 + $0x10] sm:$0xf]
    %v125 = vld [vmem:[#allocation8 + $0x14] sm:$0xf]
    %v126 = vld [vmem:[#allocation8 + $0x18] sm:$0xf]
    %v127 = vld [vmem:[#allocation8 + $0x1c] sm:$0xf]
    %v128 = vld [vmem:[#allocation8 + $0x20] sm:$0xf]
    %v129 = vld [vmem:[#allocation8 + $0x24] sm:$0xf]
    %v130 = vld [vmem:[#allocation8 + $0x28] sm:$0xf]
    %v131 = vld [vmem:[#allocation8 + $0x2c] sm:$0xf]
    %v132 = vld [vmem:[#allocation8 + $0x30] sm:$0xf]
    %v133 = vld [vmem:[#allocation8 + $0x34] sm:$0xf]
    %v134 = vld [vmem:[#allocation8 + $0x38] sm:$0xf]
    %v135 = vld [vmem:[#allocation8 + $0x3c] sm:$0xf]
    %v136 = vld [vmem:[%s3] sm:$0x1]
    %v138 = vperm.slane %v136, 0
    %v156 = vunpack.c.l.b16 %v120
    %v157 = vunpack.c.l.b16 %v121
    %v158 = vunpack.c.l.b16 %v122
    %v159 = vunpack.c.l.b16 %v123
    %v160 = vunpack.c.l.b16 %v124
    %v161 = vunpack.c.l.b16 %v125
    %v162 = vunpack.c.l.b16 %v126
    %v163 = vunpack.c.l.b16 %v127
    %v164 = vunpack.c.l.b16 %v128
    %v165 = vunpack.c.l.b16 %v129
    %v166 = vunpack.c.l.b16 %v130
    %v167 = vunpack.c.l.b16 %v131
    %v168 = vunpack.c.l.b16 %v132
    %v169 = vunpack.c.l.b16 %v133
    %v170 = vunpack.c.l.b16 %v134
    %v171 = vunpack.c.l.b16 %v135
    %v172 = vpack.c.b16 %v157, %v156
    %v173 = vpack.c.b16 %v159, %v158
    %v174 = vpack.c.b16 %v161, %v160
    %v175 = vpack.c.b16 %v163, %v162
    %v176 = vpack.c.b16 %v165, %v164
    %v177 = vpack.c.b16 %v167, %v166
    %v178 = vpack.c.b16 %v169, %v168
    %v179 = vpack.c.b16 %v171, %v170
    %188 = vmatpush.bf16.msra.mxu0 %v179
    %189 = vmatpush.bf16.msra.mxu0 %v178
    %190 = vmatpush.bf16.msra.mxu0 %v177
    %191 = vmatpush.bf16.msra.mxu0 %v176
    %192 = vmatpush.bf16.msra.mxu0 %v175
    %193 = vmatpush.bf16.msra.mxu0 %v174
    %194 = vmatpush.bf16.msra.mxu0 %v173
    %195 = vmatpush.bf16.msra.mxu0 %v172
    %196 = vmatmul.bf16.gmra.mxu0 %v119
    %v197 = vpop.f32.mrf.mxu0
    %v198 = vadd.f32 %v138, %v197
    %v199 = vpop.f32.mrf.mxu0
    %200 = vdwg.mxu0
    %v201 = vmax.f32 %v198, 0.0
    %v202 = vpack.c.bf16 %v201, %v201
    %v203 = vld [vmem:[#allocation10] sm:$0xf]
    %v204 = vld [vmem:[#allocation10 + $0x4] sm:$0xf]
    %v205 = vld [vmem:[#allocation10 + $0x8] sm:$0xf]
    %v206 = vld [vmem:[#allocation10 + $0xc] sm:$0xf]
    %v207 = vld [vmem:[#allocation10 + $0x10] sm:$0xf]
    %v208 = vld [vmem:[#allocation10 + $0x14] sm:$0xf]
    %v209 = vld [vmem:[#allocation10 + $0x18] sm:$0xf]
    %v210 = vld [vmem:[#allocation10 + $0x1c] sm:$0xf]
    %v211 = vld [vmem:[#allocation10 + $0x20] sm:$0xf]
    %v212 = vld [vmem:[#allocation10 + $0x24] sm:$0xf]
    %v213 = vld [vmem:[#allocation10 + $0x28] sm:$0xf]
    %v214 = vld [vmem:[#allocation10 + $0x2c] sm:$0xf]
    %v215 = vld [vmem:[#allocation10 + $0x30] sm:$0xf]
    %v216 = vld [vmem:[#allocation10 + $0x34] sm:$0xf]
    %v217 = vld [vmem:[#allocation10 + $0x38] sm:$0xf]
    %v218 = vld [vmem:[#allocation10 + $0x3c] sm:$0xf]
    %v219 = vld [vmem:[%s5] sm:$0x1]
    %v221 = vperm.slane %v219, 0
    %v239 = vunpack.c.l.b16 %v203
    %v240 = vunpack.c.l.b16 %v204
    %v241 = vunpack.c.l.b16 %v205
    %v242 = vunpack.c.l.b16 %v206
    %v243 = vunpack.c.l.b16 %v207
    %v244 = vunpack.c.l.b16 %v208
    %v245 = vunpack.c.l.b16 %v209
    %v246 = vunpack.c.l.b16 %v210
    %v247 = vunpack.c.l.b16 %v211
    %v248 = vunpack.c.l.b16 %v212
    %v249 = vunpack.c.l.b16 %v213
    %v250 = vunpack.c.l.b16 %v214
    %v251 = vunpack.c.l.b16 %v215
    %v252 = vunpack.c.l.b16 %v216
    %v253 = vunpack.c.l.b16 %v217
    %v254 = vunpack.c.l.b16 %v218
    %v255 = vpack.c.b16 %v240, %v239
    %v256 = vpack.c.b16 %v242, %v241
    %v257 = vpack.c.b16 %v244, %v243
    %v258 = vpack.c.b16 %v246, %v245
    %v259 = vpack.c.b16 %v248, %v247
    %v260 = vpack.c.b16 %v250, %v249
    %v261 = vpack.c.b16 %v252, %v251
    %v262 = vpack.c.b16 %v254, %v253
    %271 = vmatpush.bf16.msra.mxu0 %v262
    %272 = vmatpush.bf16.msra.mxu0 %v261
    %273 = vmatpush.bf16.msra.mxu0 %v260
    %274 = vmatpush.bf16.msra.mxu0 %v259
    %275 = vmatpush.bf16.msra.mxu0 %v258
    %276 = vmatpush.bf16.msra.mxu0 %v257
    %277 = vmatpush.bf16.msra.mxu0 %v256
    %278 = vmatpush.bf16.msra.mxu0 %v255
    %279 = vmatmul.bf16.gmra.mxu0 %v202
    %v280 = vpop.f32.mrf.mxu0
    %v281 = vadd.f32 %v221, %v280
    %v282 = vpop.f32.mrf.mxu0
    %283 = vdwg.mxu0
    %284 = vst [vmem:[#allocation11] sm:$0xff] %v281
    // Predicated region
    $region34: #{tpu_custom_call.1} parent=1 // pred_check
      _
    $region35: #{tpu_custom_call.1} parent=1 // pred_check_branch
      %286 = sbr.rel (0) target = $region37
    $region36: #{tpu_custom_call.1} parent=1 // pred_region
      %288 = vsyncadd [#allocation7], 0
      %s290 = sshll.u32 [#allocation11], 4
      %s291 = int_to_ptr.vmem [resolvable:$true] %s290
      %s292 = sshll.u32 %s6, 4
      %s293 = int_to_ptr.hbm [resolvable:$true] %s292
      %295 = dma.vmem_to_hbm [thread:$0]  %s291, 128, %s293, [#allocation7]
    $region37: #{tpu_custom_call.1} parent=1 // pred_fallthru
      _
    // Predicated region
    $region38: #{tpu_custom_call.1} parent=1 // pred_check
      _
    $region39: #{tpu_custom_call.1} parent=1 // pred_check_branch
      %297 = sbr.rel (0) target = $region41
    $region40: #{tpu_custom_call.1} parent=1 // pred_region
      %299 = dma.done [#allocation7], 128
    $region41: #{tpu_custom_call.1} parent=1 // pred_fallthru
      _
    %300 = vsyncpa [#allocation6], 1
    %301 = vsyncpa [#allocation9], 1
    %302 = vsyncpa [#allocation7], 1

</llo_original>
